<compile_context>
chip_gen: v7x
topology: tpu7x:2x2x1
jax: 0.10.0
libtpu: 0.0.40
codegen_flags: <defaults>
</compile_context>

<pallas_src>
import functools

import jax
import jax.numpy as jnp
from jax.experimental import pallas as pl
from jax.experimental.pallas import tpu as pltpu


def _round_up(x, m):
    return ((x + m - 1) // m) * m


def _cdiv(a, b):
    return -(-a // b)


# --------------------------------------------------------------------------- #
# Host-side chip heuristics (safe fallbacks; only affects tiling choices).
# --------------------------------------------------------------------------- #
def _chip_config():
    try:
        kind = jax.devices()[0].device_kind.lower()
    except Exception:
        kind = ""
    old_gen = any(t in kind for t in ("v2", "v3", "v4", "v5"))
    is_v6 = "v6" in kind
    two_core = bool(kind) and not old_gen and not is_v6     # v7x+: 2 TensorCores/chip
    return dict(
        # v6e/v7x MXU is 256 deep -> pack K=256; v5e's 128x128 MXU is fed at 128.
        lane_target=128 if old_gen else 256,
        # v7x: >= 2 grid steps per TensorCore so the pipeline hides tile DMAs;
        # v5e/v6e are single-TC, one bigger tile is strictly better.
        min_tiles=4 if two_core else 1,
        # v7x has 64 MiB VMEM per TC; v5e/v6e have 128 MiB.
        tm_target=256 if two_core else 512,
        vmem_budget=(20 << 20) if two_core else (48 << 20),
        vmem_cap=(48 << 20) if two_core else (88 << 20),
    )


# --------------------------------------------------------------------------- #
# pltpu.roll direction probe (cached).  The butterfly max must know whether
# roll matches jnp.roll (output[i] = input[i - shift]) to build exact masks.
# --------------------------------------------------------------------------- #
_ROLL_IS_JNP = None


def _roll_matches_jnp():
    global _ROLL_IS_JNP
    if _ROLL_IS_JNP is None:
        def probe(x_ref, o_ref):
            o_ref[...] = pltpu.roll(x_ref[...], 1, 1)

        x = jnp.tile(jnp.arange(128, dtype=jnp.float32)[None, :], (8, 1))
        out = pl.pallas_call(
            probe, out_shape=jax.ShapeDtypeStruct((8, 128), jnp.float32))(x)
        _ROLL_IS_JNP = bool(out[0, 1] == 0.0)   # jnp.roll moves element 0 to index 1
    return _ROLL_IS_JNP


# --------------------------------------------------------------------------- #
# Kernel
# --------------------------------------------------------------------------- #
def _gfwn_kernel(x_ref, beta_ref, wf_ref, bf_ref, seg_ref, segTg_ref,
                 sm_sum_ref, sm_bcast_ref, alpha_ref, o_ref, *, d, roll_is_jnp):
    """One lane-dense tile of packed grouped rows.

    x_ref       : (TM, W)    W = P * group_dim  (P grouped rows packed per row)
    beta_ref    : (1, W)     GroupNorm bias, tiled P times (gamma folded into segTg)
    wf_ref      : (W, 2W)    fused block-diagonal [W1.T | W2.T]
    bf_ref      : (1, 2W)    fused linear biases
    seg_ref     : (W, PG)    channel -> GroupNorm sub-group one-hot, scaled by 1/sub
    segTg_ref   : (PG, W)    sub-group -> channel one-hot with gamma folded in
    sm_sum_ref  : (2W, NS)   column -> softmax segment one-hot
    sm_bcast_ref: (NS, 2W)   softmax segment -> column broadcast one-hot
    alpha_ref   : (1, 1)     scalar gain (SMEM)
    o_ref       : (TM, W)
    """
    x = x_ref[...]
    w = x.shape[1]

    # ---- GroupNorm stats: two small segment-mean matmuls (no sublane concats) ----
    mean_g = jnp.dot(x, seg_ref[...], preferred_element_type=jnp.float32)      # (TM, PG)
    ex2_g = jnp.dot(x * x, seg_ref[...], preferred_element_type=jnp.float32)   # (TM, PG)
    var_g = jnp.maximum(ex2_g - mean_g * mean_g, 0.0)      # clamp one-pass variance
    inv_std_g = jax.lax.rsqrt(var_g + 1e-5)
    # Broadcast per-sub-group scale/shift back to channels on the MXU (gamma folded).
    scale = jnp.dot(inv_std_g, segTg_ref[...], preferred_element_type=jnp.float32)
    shift = jnp.dot(-mean_g * inv_std_g, segTg_ref[...],
                    preferred_element_type=jnp.float32)
    x_norm = x * scale + shift + beta_ref[...]

    # ---- both linear branches in a single fused (W, 2W) MXU matmul ----
    y = jnp.dot(x_norm.astype(wf_ref.dtype), wf_ref[...],
                preferred_element_type=jnp.float32) + bf_ref[...]              # (TM, 2W)

    # ---- per-segment max over each group_dim-wide block of y ----
    two_w = y.shape[1]
    n_seg = two_w // d
    if n_seg <= 4:
        # Few wide (lane-aligned) segments: sliced reductions + exact one-hot bcast.
        seg_max = jnp.concatenate(
            [jnp.max(y[:, s * d:(s + 1) * d], axis=-1, keepdims=True)
             for s in range(n_seg)], axis=-1)                                  # (TM, NS)
        y_max = jnp.dot(seg_max, sm_bcast_ref[...],
                        preferred_element_type=jnp.float32)
    else:
        # Many narrow segments: ceil(log2(d))-step circular-within-segment
        # butterfly max (XLU rolls) instead of n_seg masked full-lane reductions.
        off = jax.lax.broadcasted_iota(jnp.int32, (1, two_w), 1) % d
        y_max = y
        s = 1
        while s < d:
            r_near = pltpu.roll(y_max, s, 1)                   # same segment, no wrap
            r_wrap = pltpu.roll(y_max, (s - d) % two_w, 1)     # same segment, wrapped
            sel = (off >= s) if roll_is_jnp else (off < d - s)
            y_max = jnp.maximum(y_max, jnp.where(sel, r_near, r_wrap))
            s *= 2

    e = jnp.exp(y - y_max)
    # Reciprocal + Newton step only on the small (TM, NS) segment sums, then
    # broadcast the already-inverted values exactly with the one-hot matmul.
    denom = jnp.dot(e, sm_sum_ref[...], preferred_element_type=jnp.float32)    # (TM, NS)
    r = pl.reciprocal(denom, approx=True)                      # EUP slot
    r = r * (2.0 - denom * r)                                  # one Newton step
    r = r * alpha_ref[0, 0]                                    # fold alpha gain in here
    p = e * jnp.dot(r, sm_bcast_ref[...], preferred_element_type=jnp.float32)  # (TM, 2W)

    weights = p[:, :w] + p[:, w:]
    o_ref[...] = (x_norm * weights).astype(o_ref.dtype)


# --------------------------------------------------------------------------- #
# Host wrappers
# --------------------------------------------------------------------------- #
def gfwn_prepare(params, feature_dim, groups, *, lane_target=None,
                 use_bf16_matmul=False):
    """Precompute all constant kernel operands once per parameter update."""
    F = int(feature_dim)
    assert F % groups == 0, "feature_dim must be divisible by groups"
    D = F // groups                        # group_dim
    assert D % groups == 0, "GroupNorm(groups, group_dim) needs group_dim % groups == 0"
    sub = D // groups                      # channels per GroupNorm sub-group
    cfg = _chip_config()
    if lane_target is None:
        lane_target = cfg["lane_target"]

    # Lane packing: make the kernel row a lane multiple when group_dim is small.
    if D % lane_target == 0:
        P = 1
    elif lane_target % D == 0:
        P = lane_target // D
    elif D % 128 == 0:
        P = 1
    elif 128 % D == 0:
        P = 128 // D
    else:
        P = 1   # TODO(synk): pad group_dim up to a lane multiple for full lane density
    W = P * D
    PG = P * groups                        # GroupNorm sub-groups per packed row
    NS = 2 * P                             # softmax segments in the fused (TM, 2W) slab

    f32 = jnp.float32
    ch = jnp.arange(W) // sub
    gid = jnp.arange(PG)
    gamma_t = jnp.tile(params["gn_weight"].astype(f32), P)                     # (W,)
    seg_stat = (ch[:, None] == gid[None, :]).astype(f32) / float(sub)          # (W, PG)
    segT_g = (ch[None, :] == gid[:, None]).astype(f32) * gamma_t[None, :]      # (PG, W)
    col = jnp.arange(2 * W) // D
    sid = jnp.arange(NS)
    sm_sum = (col[:, None] == sid[None, :]).astype(f32)                        # (2W, NS)
    sm_bcast = (col[None, :] == sid[:, None]).astype(f32)                      # (NS, 2W)

    beta = jnp.tile(params["gn_bias"].astype(f32), P).reshape(1, W)
    eye_p = jnp.eye(P, dtype=f32)
    w1t = params["w1"].T.astype(f32)       # (in, out) so the kernel does x @ w1t
    w2t = params["w2"].T.astype(f32)
    wf = jnp.concatenate([jnp.kron(eye_p, w1t), jnp.kron(eye_p, w2t)], axis=1)  # (W, 2W)
    if use_bf16_matmul:
        wf = wf.astype(jnp.bfloat16)       # optional fast mode (relaxes f32 parity)
    bf = jnp.concatenate([jnp.tile(params["b1"].astype(f32), P),
                          jnp.tile(params["b2"].astype(f32), P)]).reshape(1, 2 * W)
    alpha = params["alpha"].reshape(1, 1).astype(f32)

    roll_is_jnp = _roll_matches_jnp() if NS > 4 else True

    return dict(feature_dim=F, groups=groups, D=D, P=P, W=W, PG=PG, NS=NS,
                cfg=cfg, roll_is_jnp=roll_is_jnp, beta=beta, wf=wf, bf=bf,
                seg_stat=seg_stat, segT_g=segT_g, sm_sum=sm_sum,
                sm_bcast=sm_bcast, alpha=alpha)


def _size_tile(np_rows, W, PG, NS, cfg):
    """Pick the row tile from a VMEM budget that includes in-kernel temporaries."""
    f32 = 4

    def est(tm):
        io = 2 * 2 * tm * W * f32                     # x + out tiles, double-buffered
        temps = 8 * tm * 2 * W * f32                  # y / e / p / x_norm / roll temps
        wts = 2 * (W * 2 * W + 3 * W) * f32           # fused weight + bias/beta (x2 buf)
        segs = 2 * (2 * W * PG + 4 * W * NS) * f32    # one-hot segment matrices (x2 buf)
        return io + temps + wts + segs

    tm = cfg["tm_target"]
    while tm > 8 and est(tm) > cfg["vmem_budget"]:
        tm //= 2
    tm_cap = max(8, (np_rows // 8) * 8)               # block rows must fit the array
    tm = min(tm, tm_cap)
    if cfg["min_tiles"] > 1 and np_rows >= cfg["min_tiles"] * 8:
        nt = max(cfg["min_tiles"], _cdiv(np_rows, tm))
        tm = min(tm_cap, _round_up(_cdiv(np_rows, nt), 8))
    return tm, est(tm)


def gfwn_apply(x, prep):
    """GFWN forward with constants prepared by gfwn_prepare.  x: (B, feature_dim)."""
    B, F = x.shape
    assert F == prep["feature_dim"]
    D, P, W = prep["D"], prep["P"], prep["W"]
    PG, NS, groups = prep["PG"], prep["NS"], prep["groups"]
    cfg = prep["cfg"]
    N = B * groups

    # Pack P grouped rows per lane-dense kernel row.  Pad only up to the packing
    # multiple (min 8 packed rows) -- never to the tile size -- so large batches
    # do not pay an extra full HBM read+write; the ragged last grid block is
    # masked by Pallas and all math is row-local.
    np_rows = max(_cdiv(N, P), 8)
    rows_needed = np_rows * P
    xg = x.reshape(N, D).astype(jnp.float32)
    if rows_needed != N:
        xg = jnp.concatenate(
            [xg, jnp.zeros((rows_needed - N, D), jnp.float32)], axis=0)
    xp = xg.reshape(np_rows, W)

    tm, est = _size_tile(np_rows, W, PG, NS, cfg)
    grid = _cdiv(np_rows, tm)
    vmem_limit = int(min(cfg["vmem_cap"], max(32 << 20, est + (8 << 20))))

    kernel = functools.partial(_gfwn_kernel, d=D, roll_is_jnp=prep["roll_is_jnp"])
    row_spec = pl.BlockSpec((tm, W), lambda i: (i, 0))

    def const(shape):
        # Grid-invariant operands: the pipeline skips re-fetch when the block
        # index is unchanged, so these cost VMEM space only (budgeted above).
        # TODO(synk): tile the fused 2W output dim when the weight alone exceeds
        # the VMEM budget (very large group_dim, mainly v7x).
        return pl.BlockSpec(shape, lambda i: (0, 0))

    out = pl.pallas_call(
        kernel,
        out_shape=jax.ShapeDtypeStruct((np_rows, W), jnp.float32),
        grid_spec=pltpu.PrefetchScalarGridSpec(
            num_scalar_prefetch=0,
            grid=(grid,),
            in_specs=[
                row_spec,                                   # packed input rows
                const((1, W)),                              # beta (gamma folded in segT)
                const((W, 2 * W)), const((1, 2 * W)),       # fused weight, bias
                const((W, PG)), const((PG, W)),             # GroupNorm seg matrices
                const((2 * W, NS)), const((NS, 2 * W)),     # softmax seg matrices
                pl.BlockSpec(memory_space=pltpu.MemorySpace.SMEM),   # alpha scalar
            ],
            out_specs=row_spec,
        ),
        compiler_params=pltpu.CompilerParams(
            dimension_semantics=("parallel",),
            vmem_limit_bytes=vmem_limit,
        ),
    )(xp, prep["beta"], prep["wf"], prep["bf"], prep["seg_stat"],
      prep["segT_g"], prep["sm_sum"], prep["sm_bcast"], prep["alpha"])

    return out.reshape(np_rows * P, D)[:N].reshape(B, F)


def gfwn_forward(x, params, *, groups, **prep_kwargs):
    """Convenience one-shot wrapper (prepare + apply)."""
    return gfwn_apply(x, gfwn_prepare(params, x.shape[1], groups, **prep_kwargs))


# --------------------------------------------------------------------------- #
# Reference + params
# --------------------------------------------------------------------------- #
def gfwn_reference(x, params, *, groups):
    """Pure-JAX reference mirroring the PyTorch forward (for verification)."""
    B, F = x.shape
    D = F // groups
    sub = D // groups
    xg = x.reshape(B * groups, D)

    xs = xg.reshape(B * groups, groups, sub)
    mean = xs.mean(axis=-1, keepdims=True)
    var = xs.var(axis=-1, keepdims=True)
    xn = ((xs - mean) / jnp.sqrt(var + 1e-5)).reshape(B * groups, D)
    xn = xn * params["gn_weight"][None, :] + params["gn_bias"][None, :]

    y1 = xn @ params["w1"].T + params["b1"][None, :]
    y2 = xn @ params["w2"].T + params["b2"][None, :]
    s1 = jax.nn.softmax(y1, axis=-1)
    s2 = jax.nn.softmax(y2, axis=-1)
    out = params["alpha"][0] * (xn * s1 + xn * s2)
    return out.reshape(B, F)


def init_params(key, feature_dim, groups):
    D = feature_dim // groups
    k = jax.random.split(key, 6)
    return {
        "gn_weight": 1.0 + 0.1 * jax.random.normal(k[0], (D,), jnp.float32),
        "gn_bias": 0.1 * jax.random.normal(k[1], (D,), jnp.float32),
        "w1": 0.2 * jax.random.normal(k[2], (D, D), jnp.float32),   # (out, in) like nn.Linear
        "b1": 0.1 * jax.random.normal(k[3], (D,), jnp.float32),
        "w2": 0.2 * jax.random.normal(k[4], (D, D), jnp.float32),
        "b2": 0.1 * jax.random.normal(k[5], (D,), jnp.float32),
        "alpha": jnp.ones((1,), jnp.float32),
    }


if __name__ == "__main__":
    key = jax.random.PRNGKey(0)

    # Small demo (group_dim = 16): exercises the lane-packed butterfly-softmax path.
    batch, feature_dim, groups = 2, 64, 4
    kx, kp = jax.random.split(key)
    x = jax.random.normal(kx, (batch, feature_dim), jnp.float32)
    params = init_params(kp, feature_dim, groups)

    prep = gfwn_prepare(params, feature_dim, groups)       # constants hoisted/cached
    out = jax.block_until_ready(gfwn_apply(x, prep))
    ref = gfwn_reference(x, params, groups=groups)
    assert out.shape == (batch, feature_dim)
    err = float(jnp.max(jnp.abs(out - ref)))
    assert jnp.allclose(out, ref, atol=1e-4, rtol=1e-4), err

    # Larger check (group_dim = 128): exercises the wide-segment path and bigger tiles.
    batch2, feature_dim2, groups2 = 64, 512, 4
    kx2, kp2 = jax.random.split(jax.random.PRNGKey(1))
    x2 = jax.random.normal(kx2, (batch2, feature_dim2), jnp.float32)
    params2 = init_params(kp2, feature_dim2, groups2)
    prep2 = gfwn_prepare(params2, feature_dim2, groups2)
    out2 = jax.block_until_ready(gfwn_apply(x2, prep2))
    ref2 = gfwn_reference(x2, params2, groups=groups2)
    err2 = float(jnp.max(jnp.abs(out2 - ref2)))
    assert jnp.allclose(out2, ref2, atol=1e-4, rtol=1e-4), err2

    print("KERNEL_OK")
</pallas_src>

<mosaic_0001>
module attributes {stable_mosaic.version = 11 : i64} {
  func.func @probe(%arg0: memref<8x128xf32, #tpu.memory_space<vmem>>, %arg1: memref<8x128xf32, #tpu.memory_space<vmem>>) attributes {dimension_semantics = [], scalar_prefetch = 0 : i64, scratch_operands = 0 : i64, tpu.core_type = #tpu.core_type<tc>} {
    %c0 = arith.constant 0 : index
    %c0_0 = arith.constant 0 : index
    %0 = vector.load %arg0[%c0, %c0_0] : memref<8x128xf32, #tpu.memory_space<vmem>>, vector<8x128xf32>
    %c1_i32 = arith.constant 1 : i32
    %1 = tpu.dynamic_rotate %0 by %c1_i32 dim 1 : vector<8x128xf32>, i32 -> vector<8x128xf32>
    %c0_1 = arith.constant 0 : index
    %c0_2 = arith.constant 0 : index
    %2 = vector.load %arg1[%c0_1, %c0_2] : memref<8x128xf32, #tpu.memory_space<vmem>>, vector<8x128xf32>
    tpu.vector_store %arg1[%c0_1, %c0_2], %1 {strides = array<i32>} : memref<8x128xf32, #tpu.memory_space<vmem>>, vector<8x128xf32>,
    return
  }
}

</mosaic_0001>

<llo_original>
// kernel: tpu_custom_call.1
$region0: #{tpu_custom_call.1}
  #allocation0 [shape = 'u32[]', space=smem, size = 0x4, offset = 0x4, fixed_abs, tag = 'smem constant byte address 0x4 - core index']
  #allocation1 [shape = 'u32[144,128]{1,0:T(1,128)}', space=vmem, size = 0x12000, scoped, tag = 'internal scratch']
  %s0 = inlined_call_operand.hbm [shape: f32[8,128], index: 0, kind: input, shape index: {}]
  %s1 = inlined_call_operand.hbm [shape: f32[8,128], index: 1, kind: output, shape index: {}]
  %s2 = sld [smem:[#allocation0]]
  $region18: #{tpu_custom_call.1} parent=0
    _
  %s4 = ssub.s32 1, %s2
  %s5 = scalar_select 0, %s4, %s2
  $region1: #{tpu_custom_call.1} parent=0
    #allocation2 [shape = 'u8[4096]{0}', space=vmem, size = 0x1000, scoped, tag = 'input window, operand 0, single buffered']
    #allocation3 [shape = 's32[1]{0}', space=sflag, size = 0x4, scoped, tag = 'scoped memory for tpu_custom_call.1']
    #allocation4 [shape = 's32[1]{0}', space=sflag, size = 0x4, scoped, tag = 'scoped memory for tpu_custom_call.1']
    #allocation5 [shape = 'u8[4096]{0}', space=vmem, size = 0x1000, scoped, tag = 'output window, operand 0, single buffered']
    %6 = vsyncpa [#allocation3], 0
    %7 = vsyncpa [#allocation4], 0
    // Predicated region
    $region2: #{tpu_custom_call.1} parent=1 // pred_check
      _
    $region3: #{tpu_custom_call.1} parent=1 // pred_check_branch
      %9 = sbr.rel (0) target = $region5
    $region4: #{tpu_custom_call.1} parent=1 // pred_region
      %s11 = ssub.s32 128, 128
      %12 = vsyncadd [#allocation3], %s11
      %s14 = sshll.u32 [#allocation2], 4
      %s15 = int_to_ptr.vmem [resolvable:$true] %s14
      %17 = dma.hbm_to_vmem [thread:$0]  %s0, 128, %s15, [#allocation3]
    $region5: #{tpu_custom_call.1} parent=1 // pred_fallthru
      _
    // Predicated region
    $region6: #{tpu_custom_call.1} parent=1 // pred_check
      _
    $region7: #{tpu_custom_call.1} parent=1 // pred_check_branch
      %19 = sbr.rel (0) target = $region9
    $region8: #{tpu_custom_call.1} parent=1 // pred_region
      %20 = dma.done [#allocation3], 128
    $region9: #{tpu_custom_call.1} parent=1 // pred_fallthru
      _
    %v21 = vld [vmem:[#allocation2] sm:$0xff]
    %22 = vrot.lane.b32.xlu0 %v21, 1
    %v23 = vpop.permute.xlu0 %22
    %24 = vst [vmem:[#allocation5] sm:$0xff] %v23
    // Predicated region
    $region10: #{tpu_custom_call.1} parent=1 // pred_check
      _
    $region11: #{tpu_custom_call.1} parent=1 // pred_check_branch
      %26 = sbr.rel (0) target = $region13
    $region12: #{tpu_custom_call.1} parent=1 // pred_region
      %s28 = ssub.s32 128, 128
      %29 = vsyncadd [#allocation4], %s28
      %s31 = sshll.u32 [#allocation5], 4
      %s32 = int_to_ptr.vmem [resolvable:$true] %s31
      %34 = dma.vmem_to_hbm [thread:$0]  %s32, 128, %s1, [#allocation4]
    $region13: #{tpu_custom_call.1} parent=1 // pred_fallthru
      _
    // Predicated region
    $region14: #{tpu_custom_call.1} parent=1 // pred_check
      _
    $region15: #{tpu_custom_call.1} parent=1 // pred_check_branch
      %36 = sbr.rel (0) target = $region17
    $region16: #{tpu_custom_call.1} parent=1 // pred_region
      %37 = dma.done [#allocation4], 128
    $region17: #{tpu_custom_call.1} parent=1 // pred_fallthru
      _
    %38 = vsyncpa [#allocation3], 1
    %39 = vsyncpa [#allocation4], 1

</llo_original>
